<compile_context>
chip_gen: v5e
topology: v5e:2x2
jax: 0.10.0
libtpu: 0.0.40
codegen_flags: <defaults>
</compile_context>

<pallas_src>
import math
import jax
import jax.numpy as jnp
from jax.experimental import pallas as pl
from jax.experimental.pallas import tpu as pltpu

SCALE_MIN = 0.01
SCALE_MAX = 10.0


def _gsde_kernel(log_sigma_ref, mu_ref, state_ref, eps_ref,
                 sigma_out_ref, action_ref):
    # sigma = clamp(softplus(log_sigma), scale_min, scale_max)   -- tiny (A, S)
    log_sigma = log_sigma_ref[...].astype(jnp.float32)           # (A, S)
    sigma = jnp.logaddexp(log_sigma, 0.0)                        # softplus (EUP)
    sigma = jnp.clip(sigma, SCALE_MIN, SCALE_MAX)

    # Batch-on-lanes layout: last dim is the batch tile (lane-dense).
    state = state_ref[...].astype(jnp.float32)                   # (S, tB)
    eps = eps_ref[...].astype(jnp.float32)                       # (A, S, tB)
    mu = mu_ref[...].astype(jnp.float32)                         # (A, tB)

    # Shared product: ss = sigma * state, reused for both outputs.
    ss = sigma[:, :, None] * state[None, :, :]                   # (A, S, tB)

    # eps_vec = sum_S(sigma * eps * state) = sum_S(ss * eps)
    eps_vec = jnp.sum(ss * eps, axis=1)                          # (A, tB)
    action_ref[...] = (mu + eps_vec).astype(action_ref.dtype)

    # sigma_out = sqrt(clamp_min(sum_S((sigma * state)^2), 1e-5))
    sig2 = jnp.sum(ss * ss, axis=1)                              # (A, tB)
    sigma_out_ref[...] = jnp.sqrt(jnp.maximum(sig2, 1e-5)).astype(
        sigma_out_ref.dtype)


def gsde_forward(log_sigma, mu, state, eps_gsde, *, block_b=2048):
    """Pallas implementation of gSDEModule.forward (RANDOM exploration).

    Inputs use the natural torchrl layout:
      mu (B, A), state (B, S), eps_gsde (B, A, S), log_sigma (A, S).
    eps_gsde/state/mu may be bf16 (halves HBM traffic); compute is f32.
    Returns (mu, sigma, action, _eps_gSDE), matching the PyTorch module.
    """
    B, A = mu.shape
    S = state.shape[-1]
    assert log_sigma.shape == (A, S)
    assert eps_gsde.shape == (B, A, S)

    # Layout plumbing: put the (potentially large) batch dim on lanes.
    mu_t = jnp.transpose(mu, (1, 0))                 # (A, B)
    state_t = jnp.transpose(state, (1, 0))           # (S, B)
    eps_t = jnp.transpose(eps_gsde, (1, 2, 0))       # (A, S, B)

    # Batch tile: full B when small, else a 128-multiple block (satisfies the
    # (8,128) rule and keeps double-buffered VMEM use small even on v7x).
    if B <= block_b:
        tb = B
    else:
        tb = (block_b // 128) * 128
    grid = (pl.cdiv(B, tb),)

    sigma_out_t, action_t = pl.pallas_call(
        _gsde_kernel,
        out_shape=(
            jax.ShapeDtypeStruct((A, B), jnp.float32),   # sigma (transposed)
            jax.ShapeDtypeStruct((A, B), jnp.float32),   # action (transposed)
        ),
        grid=grid,
        in_specs=[
            pl.BlockSpec((A, S), lambda b: (0, 0)),        # log_sigma (replicated)
            pl.BlockSpec((A, tb), lambda b: (0, b)),       # mu
            pl.BlockSpec((S, tb), lambda b: (0, b)),       # state
            pl.BlockSpec((A, S, tb), lambda b: (0, 0, b)),  # eps (dominant stream)
        ],
        out_specs=(
            pl.BlockSpec((A, tb), lambda b: (0, b)),
            pl.BlockSpec((A, tb), lambda b: (0, b)),
        ),
        compiler_params=pltpu.CompilerParams(
            dimension_semantics=("parallel",),
        ),
    )(log_sigma, mu_t, state_t, eps_t)

    sigma_out = jnp.transpose(sigma_out_t, (1, 0))   # (B, A)
    action = jnp.transpose(action_t, (1, 0))         # (B, A)
    return mu, sigma_out, action, eps_gsde


def maybe_resample_eps(key, eps, batch_shape, action_dim, state_dim):
    """Mirrors the module's noise-reset protocol without a host sync:
    if _eps_gSDE only has batch-many elements (static shape check) and is all
    zero (traced check), a fresh standard-normal (*batch, A, S) noise is used.
    """
    nbatch = int(math.prod(batch_shape))
    target_shape = (*batch_shape, action_dim, state_dim)
    if eps.size == nbatch and eps.shape != target_shape:
        fresh = jax.random.normal(key, target_shape, dtype=jnp.float32)
        all_zero = jnp.all(eps == 0)
        # Traced select — no device->host round trip, jit-friendly. The
        # non-zero branch is degenerate in torchrl (it would error later);
        # broadcasting keeps shapes static here.
        existing = jnp.broadcast_to(
            eps.reshape(*batch_shape, 1, 1).astype(jnp.float32), target_shape)
        return jnp.where(all_zero, fresh, existing)
    return eps


if __name__ == "__main__":
    # Small shapes consistent with the module's forward: batch, action, state.
    B, A, S = 4, 8, 16

    key = jax.random.PRNGKey(0)
    k_mu, k_state, k_eps = jax.random.split(key, 3)

    # Parameter init as in __init__: log_sigma = zeros((action_dim, state_dim))
    log_sigma = jnp.zeros((A, S), dtype=jnp.float32)
    # TODO(synk): sigma_init buffer is registered in __init__ but unused in forward; omitted.

    mu = jax.random.normal(k_mu, (B, A), dtype=jnp.float32)
    state = jax.random.normal(k_state, (B, S), dtype=jnp.float32)

    # Environment-reset protocol: start with zero noise of batch size, resample.
    eps_reset = jnp.zeros((B,), dtype=jnp.float32)
    eps_gsde = maybe_resample_eps(k_eps, eps_reset, (B,), A, S)

    mu_out, sigma_out, action, eps_out = gsde_forward(log_sigma, mu, state, eps_gsde)
    jax.block_until_ready((mu_out, sigma_out, action, eps_out))

    # Reference check in plain JAX (same math as the PyTorch forward).
    sigma_ref = jnp.clip(jnp.logaddexp(log_sigma, 0.0), SCALE_MIN, SCALE_MAX)
    action_ref = mu + jnp.sum((sigma_ref[None] * eps_gsde) * state[:, None, :], axis=-1)
    sigma_out_ref = jnp.sqrt(jnp.maximum(
        jnp.sum((sigma_ref[None] * state[:, None, :]) ** 2, axis=-1), 1e-5))

    assert jnp.allclose(action, action_ref, atol=1e-5, rtol=1e-5)
    assert jnp.allclose(sigma_out, sigma_out_ref, atol=1e-5, rtol=1e-5)
    assert jnp.array_equal(mu_out, mu)
    assert jnp.array_equal(eps_out, eps_gsde)

    print("KERNEL_OK")
</pallas_src>

<mosaic_0001>
module attributes {stable_mosaic.version = 11 : i64} {
  func.func @_gsde_kernel(%arg0: i32, %arg1: memref<8x16xf32, #tpu.memory_space<vmem>>, %arg2: memref<8x4xf32, #tpu.memory_space<vmem>>, %arg3: memref<16x4xf32, #tpu.memory_space<vmem>>, %arg4: memref<8x16x4xf32, #tpu.memory_space<vmem>>, %arg5: memref<8x4xf32, #tpu.memory_space<vmem>>, %arg6: memref<8x4xf32, #tpu.memory_space<vmem>>) attributes {dimension_semantics = [#tpu.dimension_semantics<parallel>], iteration_bounds = array<i64: 1>, scalar_prefetch = 0 : i64, scratch_operands = 0 : i64, tpu.core_type = #tpu.core_type<tc>, window_params = [{pipeline_mode = #tpu.pipeline_mode<synchronous>, transform_indices = @transform_0, window_bounds = array<i64: 8, 16>}, {transform_indices = @transform_1, window_bounds = array<i64: 8, 4>}, {transform_indices = @transform_2, window_bounds = array<i64: 16, 4>}, {transform_indices = @transform_3, window_bounds = array<i64: 8, 16, 4>}, {transform_indices = @transform_4, window_bounds = array<i64: 8, 4>}, {transform_indices = @transform_5, window_bounds = array<i64: 8, 4>}]} {
    %c0 = arith.constant 0 : index
    %c0_0 = arith.constant 0 : index
    %0 = vector.load %arg1[%c0, %c0_0] : memref<8x16xf32, #tpu.memory_space<vmem>>, vector<8x16xf32>
    %cst = arith.constant 0.000000e+00 : f32
    %1 = vector.broadcast %cst : f32 to vector<8x16xf32>
    %2 = arith.maximumf %0, %1 : vector<8x16xf32>
    %3 = vector.broadcast %cst : f32 to vector<8x16xf32>
    %4 = arith.subf %0, %3 : vector<8x16xf32>
    %5 = arith.cmpf one, %4, %4 : vector<8x16xf32>
    %6 = vector.broadcast %cst : f32 to vector<8x16xf32>
    %7 = arith.addf %0, %6 : vector<8x16xf32>
    %8 = math.absf %4 : vector<8x16xf32>
    %cst_1 = arith.constant 0.000000e+00 : f32
    %9 = vector.broadcast %cst_1 : f32 to vector<8x16xf32>
    %10 = arith.subf %9, %8 : vector<8x16xf32>
    %11 = math.exp %10 : vector<8x16xf32>
    %12 = math.log1p %11 : vector<8x16xf32>
    %13 = arith.addf %2, %12 : vector<8x16xf32>
    %14 = arith.select %5, %7, %13 : vector<8x16xi1>, vector<8x16xf32>
    %cst_2 = arith.constant 0.00999999977 : f32
    %cst_3 = arith.constant 1.000000e+01 : f32
    %15 = vector.broadcast %cst_2 : f32 to vector<8x16xf32>
    %16 = arith.maximumf %15, %14 : vector<8x16xf32>
    %17 = vector.broadcast %cst_3 : f32 to vector<8x16xf32>
    %18 = arith.minimumf %17, %16 : vector<8x16xf32>
    %c0_4 = arith.constant 0 : index
    %c0_5 = arith.constant 0 : index
    %19 = vector.load %arg3[%c0_4, %c0_5] : memref<16x4xf32, #tpu.memory_space<vmem>>, vector<16x4xf32>
    %c0_6 = arith.constant 0 : index
    %c0_7 = arith.constant 0 : index
    %c0_8 = arith.constant 0 : index
    %20 = vector.load %arg4[%c0_6, %c0_7, %c0_8] : memref<8x16x4xf32, #tpu.memory_space<vmem>>, vector<8x16x4xf32>
    %c0_9 = arith.constant 0 : index
    %c0_10 = arith.constant 0 : index
    %21 = vector.load %arg2[%c0_9, %c0_10] : memref<8x4xf32, #tpu.memory_space<vmem>>, vector<8x4xf32>
    %22 = vector.shape_cast %18 : vector<8x16xf32> to vector<8x16x1xf32>
    %23 = vector.shape_cast %19 : vector<16x4xf32> to vector<1x16x4xf32>
    %24 = vector.broadcast %22 : vector<8x16x1xf32> to vector<8x16x4xf32>
    %25 = vector.broadcast %23 : vector<1x16x4xf32> to vector<8x16x4xf32>
    %26 = arith.mulf %24, %25 : vector<8x16x4xf32>
    %27 = arith.mulf %26, %20 : vector<8x16x4xf32>
    %cst_11 = arith.constant dense<0.000000e+00> : vector<8x4xf32>
    %28 = vector.multi_reduction <add>, %27, %cst_11 [1] : vector<8x16x4xf32> to vector<8x4xf32>
    %29 = arith.addf %21, %28 : vector<8x4xf32>
    %c0_12 = arith.constant 0 : index
    %c0_13 = arith.constant 0 : index
    %30 = vector.load %arg6[%c0_12, %c0_13] : memref<8x4xf32, #tpu.memory_space<vmem>>, vector<8x4xf32>
    tpu.vector_store %arg6[%c0_12, %c0_13], %29 {strides = array<i32>} : memref<8x4xf32, #tpu.memory_space<vmem>>, vector<8x4xf32>,
    %31 = arith.mulf %26, %26 : vector<8x16x4xf32>
    %cst_14 = arith.constant dense<0.000000e+00> : vector<8x4xf32>
    %32 = vector.multi_reduction <add>, %31, %cst_14 [1] : vector<8x16x4xf32> to vector<8x4xf32>
    %cst_15 = arith.constant 9.99999974E-6 : f32
    %33 = vector.broadcast %cst_15 : f32 to vector<8x4xf32>
    %34 = arith.maximumf %32, %33 : vector<8x4xf32>
    %35 = math.sqrt %34 : vector<8x4xf32>
    %c0_16 = arith.constant 0 : index
    %c0_17 = arith.constant 0 : index
    %36 = vector.load %arg5[%c0_16, %c0_17] : memref<8x4xf32, #tpu.memory_space<vmem>>, vector<8x4xf32>
    tpu.vector_store %arg5[%c0_16, %c0_17], %35 {strides = array<i32>} : memref<8x4xf32, #tpu.memory_space<vmem>>, vector<8x4xf32>,
    return
  }
  func.func @transform_0(%arg0: i32) -> (i32, i32) {
    %c0_i32 = arith.constant 0 : i32
    %c0_i32_0 = arith.constant 0 : i32
    %c0_i32_1 = arith.constant 0 : i32
    return %c0_i32, %c0_i32_0 : i32, i32
  }
  func.func @transform_1(%arg0: i32) -> (i32, i32) {
    %c0_i32 = arith.constant 0 : i32
    %c0_i32_0 = arith.constant 0 : i32
    return %c0_i32, %arg0 : i32, i32
  }
  func.func @transform_2(%arg0: i32) -> (i32, i32) {
    %c0_i32 = arith.constant 0 : i32
    %c0_i32_0 = arith.constant 0 : i32
    return %c0_i32, %arg0 : i32, i32
  }
  func.func @transform_3(%arg0: i32) -> (i32, i32, i32) {
    %c0_i32 = arith.constant 0 : i32
    %c0_i32_0 = arith.constant 0 : i32
    %c0_i32_1 = arith.constant 0 : i32
    return %c0_i32, %c0_i32_0, %arg0 : i32, i32, i32
  }
  func.func @transform_4(%arg0: i32) -> (i32, i32) {
    %c0_i32 = arith.constant 0 : i32
    %c0_i32_0 = arith.constant 0 : i32
    return %c0_i32, %arg0 : i32, i32
  }
  func.func @transform_5(%arg0: i32) -> (i32, i32) {
    %c0_i32 = arith.constant 0 : i32
    %c0_i32_0 = arith.constant 0 : i32
    return %c0_i32, %arg0 : i32, i32
  }
}

</mosaic_0001>

<llo_original>
// kernel: tpu_custom_call.1
$region0: #{tpu_custom_call.1}
  #allocation0 [shape = 'u32[]', space=smem, size = 0x4, offset = 0x4, fixed_abs, tag = 'smem constant byte address 0x4 - core index']
  #allocation1 [shape = 'u32[72,128]{1,0:T(1,128)}', space=vmem, size = 0x9000, scoped, tag = 'internal scratch']
  %s0 = inlined_call_operand.vmem [shape: f32[8,16], index: 0, kind: input, shape index: {}]
  %s1 = inlined_call_operand.vmem [shape: f32[8,4], index: 1, kind: input, shape index: {}]
  %s2 = inlined_call_operand.vmem [shape: f32[16,4], index: 2, kind: input, shape index: {}]
  %s3 = inlined_call_operand.vmem [shape: f32[8,16,4], index: 3, kind: input, shape index: {}]
  %s4 = inlined_call_operand.vmem [shape: f32[8,4], index: 4, kind: output, shape index: {0}]
  %s5 = inlined_call_operand.vmem [shape: f32[8,4], index: 5, kind: output, shape index: {1}]
  %6 = xla_tuple %s4, %s5
  %s7 = sld [smem:[#allocation0]]
  $region34: #{tpu_custom_call.1} parent=0
    _
  %s9 = ssub.s32 1, %s7
  %s10 = scalar_select 0, %s9, %s7
  // Predicated region
  $region2: #{tpu_custom_call.1} parent=0 // pred_check
    _
  $region3: #{tpu_custom_call.1} parent=0 // pred_check_branch
    %12 = sbr.rel (0) target = $region5
  $region4: #{tpu_custom_call.1} parent=0 // pred_region
    _
  $region5: #{tpu_custom_call.1} parent=0 // pred_fallthru
    _
  // Predicated region
  $region6: #{tpu_custom_call.1} parent=0 // pred_check
    _
  $region7: #{tpu_custom_call.1} parent=0 // pred_check_branch
    %14 = sbr.rel (0) target = $region9
  $region8: #{tpu_custom_call.1} parent=0 // pred_region
    _
  $region9: #{tpu_custom_call.1} parent=0 // pred_fallthru
    _
  // Predicated region
  $region10: #{tpu_custom_call.1} parent=0 // pred_check
    _
  $region11: #{tpu_custom_call.1} parent=0 // pred_check_branch
    %16 = sbr.rel (0) target = $region13
  $region12: #{tpu_custom_call.1} parent=0 // pred_region
    _
  $region13: #{tpu_custom_call.1} parent=0 // pred_fallthru
    _
  // Predicated region
  $region14: #{tpu_custom_call.1} parent=0 // pred_check
    _
  $region15: #{tpu_custom_call.1} parent=0 // pred_check_branch
    %18 = sbr.rel (0) target = $region17
  $region16: #{tpu_custom_call.1} parent=0 // pred_region
    _
  $region17: #{tpu_custom_call.1} parent=0 // pred_fallthru
    _
  %v19 = vld [vmem:[%s0] sm:$0xff]
  %v20 = vmax.f32 %v19, 0.0
  %vm21 = vcmp.ne.f32.partialorder %v19, %v19
  %v22 = vadd.f32 %v19, 0.0
  %v23 = vand.u32 2147483647, %v19
  %v24 = vsub.f32 0.0, %v23
  %v25 = vmul.f32 %v24, 1.442695
  %v26 = vpow.pop %v25
  %v27 = vadd.f32 %v26, 1.0
  %v28 = vlog2.pop %v27
  %v29 = vmul.f32 %v28, 0.6931472
  %v30 = vmul.f32 -0.5, %v26
  %v31 = vadd.f32 %v30, 1.0
  %v32 = vmul.f32 %v31, %v26
  %v33 = vand.u32 2147483647, %v26
  %vm34 = vcmp.lt.f32.partialorder %v33, 0.0004427343
  %v35 = vsel %vm34, %v32, %v29
  %v36 = vadd.f32 %v20, %v35
  %v37 = vsel %vm21, %v22, %v36
  %v38 = vmax.f32 %v37, 0.01
  %v39 = vmin.f32 %v38, 10.0
  %v40 = vld [vmem:[%s2] sm:$0xff]
  %v41 = vld [vmem:[%s2 + $0x8] sm:$0xff]
  %v42 = vld [vmem:[%s3] sm:$0xff]
  %v43 = vld [vmem:[%s3 + $0x8] sm:$0xff]
  %v44 = vld [vmem:[%s3 + $0x10] sm:$0xff]
  %v45 = vld [vmem:[%s3 + $0x18] sm:$0xff]
  %v46 = vld [vmem:[%s3 + $0x20] sm:$0xff]
  %v47 = vld [vmem:[%s3 + $0x28] sm:$0xff]
  %v48 = vld [vmem:[%s3 + $0x30] sm:$0xff]
  %v49 = vld [vmem:[%s3 + $0x38] sm:$0xff]
  %v50 = vld [vmem:[%s3 + $0x40] sm:$0xff]
  %v51 = vld [vmem:[%s3 + $0x48] sm:$0xff]
  %v52 = vld [vmem:[%s3 + $0x50] sm:$0xff]
  %v53 = vld [vmem:[%s3 + $0x58] sm:$0xff]
  %v54 = vld [vmem:[%s3 + $0x60] sm:$0xff]
  %v55 = vld [vmem:[%s3 + $0x68] sm:$0xff]
  %v56 = vld [vmem:[%s3 + $0x70] sm:$0xff]
  %v57 = vld [vmem:[%s3 + $0x78] sm:$0xff]
  %v58 = vld [vmem:[%s1] sm:$0xff]
  %v59 = vperm.slane %v39, 0
  %v60 = vlaneseq
  %v61 = vshrl.u32 %v60, 7
  %63 = vset.pattern.permute.xlu0 %v61
  %64 = vperm.xlu0 %63, %v59
  %v65 = vpop.permute.xlu0 %64
  %v66 = vlaneseq
  %v67 = vshrl.u32 %v66, 7
  %v68 = vadd.s32 %v67, 8
  %69 = vset.pattern.permute.xlu0 %v68
  %70 = vperm.xlu0 %69, %v59
  %v71 = vpop.permute.xlu0 %70
  %v72 = vperm.slane %v39, 1
  %v73 = vlaneseq
  %v74 = vshrl.u32 %v73, 7
  %76 = vset.pattern.permute.xlu0 %v74
  %77 = vperm.xlu0 %76, %v72
  %v78 = vpop.permute.xlu0 %77
  %v79 = vlaneseq
  %v80 = vshrl.u32 %v79, 7
  %v81 = vadd.s32 %v80, 8
  %82 = vset.pattern.permute.xlu0 %v81
  %83 = vperm.xlu0 %82, %v72
  %v84 = vpop.permute.xlu0 %83
  %v85 = vperm.slane %v39, 2
  %v86 = vlaneseq
  %v87 = vshrl.u32 %v86, 7
  %89 = vset.pattern.permute.xlu0 %v87
  %90 = vperm.xlu0 %89, %v85
  %v91 = vpop.permute.xlu0 %90
  %v92 = vlaneseq
  %v93 = vshrl.u32 %v92, 7
  %v94 = vadd.s32 %v93, 8
  %95 = vset.pattern.permute.xlu0 %v94
  %96 = vperm.xlu0 %95, %v85
  %v97 = vpop.permute.xlu0 %96
  %v98 = vperm.slane %v39, 3
  %v99 = vlaneseq
  %v100 = vshrl.u32 %v99, 7
  %102 = vset.pattern.permute.xlu0 %v100
  %103 = vperm.xlu0 %102, %v98
  %v104 = vpop.permute.xlu0 %103
  %v105 = vlaneseq
  %v106 = vshrl.u32 %v105, 7
  %v107 = vadd.s32 %v106, 8
  %108 = vset.pattern.permute.xlu0 %v107
  %109 = vperm.xlu0 %108, %v98
  %v110 = vpop.permute.xlu0 %109
  %v111 = vperm.slane %v39, 4
  %v112 = vlaneseq
  %v113 = vshrl.u32 %v112, 7
  %115 = vset.pattern.permute.xlu0 %v113
  %116 = vperm.xlu0 %115, %v111
  %v117 = vpop.permute.xlu0 %116
  %v118 = vlaneseq
  %v119 = vshrl.u32 %v118, 7
  %v120 = vadd.s32 %v119, 8
  %121 = vset.pattern.permute.xlu0 %v120
  %122 = vperm.xlu0 %121, %v111
  %v123 = vpop.permute.xlu0 %122
  %v124 = vperm.slane %v39, 5
  %v125 = vlaneseq
  %v126 = vshrl.u32 %v125, 7
  %128 = vset.pattern.permute.xlu0 %v126
  %129 = vperm.xlu0 %128, %v124
  %v130 = vpop.permute.xlu0 %129
  %v131 = vlaneseq
  %v132 = vshrl.u32 %v131, 7
  %v133 = vadd.s32 %v132, 8
  %134 = vset.pattern.permute.xlu0 %v133
  %135 = vperm.xlu0 %134, %v124
  %v136 = vpop.permute.xlu0 %135
  %v137 = vperm.slane %v39, 6
  %v138 = vlaneseq
  %v139 = vshrl.u32 %v138, 7
  %141 = vset.pattern.permute.xlu0 %v139
  %142 = vperm.xlu0 %141, %v137
  %v143 = vpop.permute.xlu0 %142
  %v144 = vlaneseq
  %v145 = vshrl.u32 %v144, 7
  %v146 = vadd.s32 %v145, 8
  %147 = vset.pattern.permute.xlu0 %v146
  %148 = vperm.xlu0 %147, %v137
  %v149 = vpop.permute.xlu0 %148
  %v150 = vperm.slane %v39, 7
  %v151 = vlaneseq
  %v152 = vshrl.u32 %v151, 7
  %154 = vset.pattern.permute.xlu0 %v152
  %155 = vperm.xlu0 %154, %v150
  %v156 = vpop.permute.xlu0 %155
  %v157 = vlaneseq
  %v158 = vshrl.u32 %v157, 7
  %v159 = vadd.s32 %v158, 8
  %160 = vset.pattern.permute.xlu0 %v159
  %161 = vperm.xlu0 %160, %v150
  %v162 = vpop.permute.xlu0 %161
  %v163 = vmul.f32 %v65, %v40
  %v164 = vmul.f32 %v71, %v41
  %v165 = vmul.f32 %v78, %v40
  %v166 = vmul.f32 %v84, %v41
  %v167 = vmul.f32 %v91, %v40
  %v168 = vmul.f32 %v97, %v41
  %v169 = vmul.f32 %v104, %v40
  %v170 = vmul.f32 %v110, %v41
  %v171 = vmul.f32 %v117, %v40
  %v172 = vmul.f32 %v123, %v41
  %v173 = vmul.f32 %v130, %v40
  %v174 = vmul.f32 %v136, %v41
  %v175 = vmul.f32 %v143, %v40
  %v176 = vmul.f32 %v149, %v41
  %v177 = vmul.f32 %v156, %v40
  %v178 = vmul.f32 %v162, %v41
  %v179 = vmul.f32 %v163, %v42
  %v180 = vmul.f32 %v164, %v43
  %v181 = vmul.f32 %v165, %v44
  %v182 = vmul.f32 %v166, %v45
  %v183 = vmul.f32 %v167, %v46
  %v184 = vmul.f32 %v168, %v47
  %v185 = vmul.f32 %v169, %v48
  %v186 = vmul.f32 %v170, %v49
  %v187 = vmul.f32 %v171, %v50
  %v188 = vmul.f32 %v172, %v51
  %v189 = vmul.f32 %v173, %v52
  %v190 = vmul.f32 %v174, %v53
  %v191 = vmul.f32 %v175, %v54
  %v192 = vmul.f32 %v176, %v55
  %v193 = vmul.f32 %v177, %v56
  %v194 = vmul.f32 %v178, %v57
  %vm195 = vcmask 31744
  %v196 = vsel %vm195, %v179, 0.0
  %v197 = vsel %vm195, %v180, 0.0
  %v198 = vadd.f32 %v196, %v197
  %v199 = vrot.slane %v198, 4
  %v200 = vadd.f32 %v198, %v199
  %v201 = vrot.slane %v200, 2
  %v202 = vadd.f32 %v200, %v201
  %v203 = vrot.slane %v202, 1
  %v204 = vadd.f32 %v202, %v203
  %v205 = vsel %vm195, %v181, 0.0
  %v206 = vsel %vm195, %v182, 0.0
  %v207 = vadd.f32 %v205, %v206
  %v208 = vrot.slane %v207, 4
  %v209 = vadd.f32 %v207, %v208
  %v210 = vrot.slane %v209, 2
  %v211 = vadd.f32 %v209, %v210
  %v212 = vrot.slane %v211, 1
  %v213 = vadd.f32 %v211, %v212
  %v214 = vsel %vm195, %v183, 0.0
  %v215 = vsel %vm195, %v184, 0.0
  %v216 = vadd.f32 %v214, %v215
  %v217 = vrot.slane %v216, 4
  %v218 = vadd.f32 %v216, %v217
  %v219 = vrot.slane %v218, 2
  %v220 = vadd.f32 %v218, %v219
  %v221 = vrot.slane %v220, 1
  %v222 = vadd.f32 %v220, %v221
  %v223 = vsel %vm195, %v185, 0.0
  %v224 = vsel %vm195, %v186, 0.0
  %v225 = vadd.f32 %v223, %v224
  %v226 = vrot.slane %v225, 4
  %v227 = vadd.f32 %v225, %v226
  %v228 = vrot.slane %v227, 2
  %v229 = vadd.f32 %v227, %v228
  %v230 = vrot.slane %v229, 1
  %v231 = vadd.f32 %v229, %v230
  %v232 = vsel %vm195, %v187, 0.0
  %v233 = vsel %vm195, %v188, 0.0
  %v234 = vadd.f32 %v232, %v233
  %v235 = vrot.slane %v234, 4
  %v236 = vadd.f32 %v234, %v235
  %v237 = vrot.slane %v236, 2
  %v238 = vadd.f32 %v236, %v237
  %v239 = vrot.slane %v238, 1
  %v240 = vadd.f32 %v238, %v239
  %v241 = vsel %vm195, %v189, 0.0
  %v242 = vsel %vm195, %v190, 0.0
  %v243 = vadd.f32 %v241, %v242
  %v244 = vrot.slane %v243, 4
  %v245 = vadd.f32 %v243, %v244
  %v246 = vrot.slane %v245, 2
  %v247 = vadd.f32 %v245, %v246
  %v248 = vrot.slane %v247, 1
  %v249 = vadd.f32 %v247, %v248
  %v250 = vsel %vm195, %v191, 0.0
  %v251 = vsel %vm195, %v192, 0.0
  %v252 = vadd.f32 %v250, %v251
  %v253 = vrot.slane %v252, 4
  %v254 = vadd.f32 %v252, %v253
  %v255 = vrot.slane %v254, 2
  %v256 = vadd.f32 %v254, %v255
  %v257 = vrot.slane %v256, 1
  %v258 = vadd.f32 %v256, %v257
  %v259 = vsel %vm195, %v193, 0.0
  %v260 = vsel %vm195, %v194, 0.0
  %v261 = vadd.f32 %v259, %v260
  %v262 = vrot.slane %v261, 4
  %v263 = vadd.f32 %v261, %v262
  %v264 = vrot.slane %v263, 2
  %v265 = vadd.f32 %v263, %v264
  %v266 = vrot.slane %v265, 1
  %v267 = vadd.f32 %v265, %v266
  %vm276 = vcmask 1041409
  %v277 = vsel %vm276, %v213, %v204
  %vm278 = vcmask 1042434
  %v279 = vsel %vm278, %v222, %v277
  %vm280 = vcmask 1043459
  %v281 = vsel %vm280, %v231, %v279
  %vm282 = vcmask 1044484
  %v283 = vsel %vm282, %v240, %v281
  %vm284 = vcmask 1045509
  %v285 = vsel %vm284, %v249, %v283
  %vm286 = vcmask 1046534
  %v287 = vsel %vm286, %v258, %v285
  %vm288 = vcmask 1047559
  %v289 = vsel %vm288, %v267, %v287
  %v291 = vadd.f32 %v58, %v289
  %292 = vst.msk [vmem:[%s5] sm:$0xff] %vm195, %v291
  %v293 = vmul.f32 %v163, %v163
  %v294 = vmul.f32 %v164, %v164
  %v295 = vmul.f32 %v165, %v165
  %v296 = vmul.f32 %v166, %v166
  %v297 = vmul.f32 %v167, %v167
  %v298 = vmul.f32 %v168, %v168
  %v299 = vmul.f32 %v169, %v169
  %v300 = vmul.f32 %v170, %v170
  %v301 = vmul.f32 %v171, %v171
  %v302 = vmul.f32 %v172, %v172
  %v303 = vmul.f32 %v173, %v173
  %v304 = vmul.f32 %v174, %v174
  %v305 = vmul.f32 %v175, %v175
  %v306 = vmul.f32 %v176, %v176
  %v307 = vmul.f32 %v177, %v177
  %v308 = vmul.f32 %v178, %v178
  %v309 = vsel %vm195, %v293, 0.0
  %v310 = vsel %vm195, %v294, 0.0
  %v311 = vadd.f32 %v309, %v310
  %v312 = vrot.slane %v311, 4
  %v313 = vadd.f32 %v311, %v312
  %v314 = vrot.slane %v313, 2
  %v315 = vadd.f32 %v313, %v314
  %v316 = vrot.slane %v315, 1
  %v317 = vadd.f32 %v315, %v316
  %v318 = vsel %vm195, %v295, 0.0
  %v319 = vsel %vm195, %v296, 0.0
  %v320 = vadd.f32 %v318, %v319
  %v321 = vrot.slane %v320, 4
  %v322 = vadd.f32 %v320, %v321
  %v323 = vrot.slane %v322, 2
  %v324 = vadd.f32 %v322, %v323
  %v325 = vrot.slane %v324, 1
  %v326 = vadd.f32 %v324, %v325
  %v327 = vsel %vm195, %v297, 0.0
  %v328 = vsel %vm195, %v298, 0.0
  %v329 = vadd.f32 %v327, %v328
  %v330 = vrot.slane %v329, 4
  %v331 = vadd.f32 %v329, %v330
  %v332 = vrot.slane %v331, 2
  %v333 = vadd.f32 %v331, %v332
  %v334 = vrot.slane %v333, 1
  %v335 = vadd.f32 %v333, %v334
  %v336 = vsel %vm195, %v299, 0.0
  %v337 = vsel %vm195, %v300, 0.0
  %v338 = vadd.f32 %v336, %v337
  %v339 = vrot.slane %v338, 4
  %v340 = vadd.f32 %v338, %v339
  %v341 = vrot.slane %v340, 2
  %v342 = vadd.f32 %v340, %v341
  %v343 = vrot.slane %v342, 1
  %v344 = vadd.f32 %v342, %v343
  %v345 = vsel %vm195, %v301, 0.0
  %v346 = vsel %vm195, %v302, 0.0
  %v347 = vadd.f32 %v345, %v346
  %v348 = vrot.slane %v347, 4
  %v349 = vadd.f32 %v347, %v348
  %v350 = vrot.slane %v349, 2
  %v351 = vadd.f32 %v349, %v350
  %v352 = vrot.slane %v351, 1
  %v353 = vadd.f32 %v351, %v352
  %v354 = vsel %vm195, %v303, 0.0
  %v355 = vsel %vm195, %v304, 0.0
  %v356 = vadd.f32 %v354, %v355
  %v357 = vrot.slane %v356, 4
  %v358 = vadd.f32 %v356, %v357
  %v359 = vrot.slane %v358, 2
  %v360 = vadd.f32 %v358, %v359
  %v361 = vrot.slane %v360, 1
  %v362 = vadd.f32 %v360, %v361
  %v363 = vsel %vm195, %v305, 0.0
  %v364 = vsel %vm195, %v306, 0.0
  %v365 = vadd.f32 %v363, %v364
  %v366 = vrot.slane %v365, 4
  %v367 = vadd.f32 %v365, %v366
  %v368 = vrot.slane %v367, 2
  %v369 = vadd.f32 %v367, %v368
  %v370 = vrot.slane %v369, 1
  %v371 = vadd.f32 %v369, %v370
  %v372 = vsel %vm195, %v307, 0.0
  %v373 = vsel %vm195, %v308, 0.0
  %v374 = vadd.f32 %v372, %v373
  %v375 = vrot.slane %v374, 4
  %v376 = vadd.f32 %v374, %v375
  %v377 = vrot.slane %v376, 2
  %v378 = vadd.f32 %v376, %v377
  %v379 = vrot.slane %v378, 1
  %v380 = vadd.f32 %v378, %v379
  %v381 = vmax.f32 %v317, 1e-05
  %v382 = vmax.f32 %v326, 1e-05
  %v383 = vmax.f32 %v335, 1e-05
  %v384 = vmax.f32 %v344, 1e-05
  %v385 = vmax.f32 %v353, 1e-05
  %v386 = vmax.f32 %v362, 1e-05
  %v387 = vmax.f32 %v371, 1e-05
  %v388 = vmax.f32 %v380, 1e-05
  %v389 = vrsqrt.pop %v381
  %v390 = vmul.f32 %v389, %v381
  %v391 = vmul.f32 %v390, %v389
  %v392 = vmul.f32 0.5, %v391
  %v393 = vsub.f32 1.5, %v392
  %v394 = vmul.f32 %v389, %v393
  %v395 = vmul.f32 %v381, %v394
  %vm396 = vcmp.eq.f32.partialorder %v381, inf
  %v397 = vsel %vm396, %v381, %v395
  %vm398 = vcmp.eq.f32.partialorder %v381, 0.0
  %v399 = vand.u32 %v381, 2147483648
  %v400 = vsel %vm398, %v399, %v397
  %v401 = vrsqrt.pop %v382
  %v402 = vmul.f32 %v401, %v382
  %v403 = vmul.f32 %v402, %v401
  %v404 = vmul.f32 0.5, %v403
  %v405 = vsub.f32 1.5, %v404
  %v406 = vmul.f32 %v401, %v405
  %v407 = vmul.f32 %v382, %v406
  %vm408 = vcmp.eq.f32.partialorder %v382, inf
  %v409 = vsel %vm408, %v382, %v407
  %vm410 = vcmp.eq.f32.partialorder %v382, 0.0
  %v411 = vand.u32 %v382, 2147483648
  %v412 = vsel %vm410, %v411, %v409
  %v413 = vrsqrt.pop %v383
  %v414 = vmul.f32 %v413, %v383
  %v415 = vmul.f32 %v414, %v413
  %v416 = vmul.f32 0.5, %v415
  %v417 = vsub.f32 1.5, %v416
  %v418 = vmul.f32 %v413, %v417
  %v419 = vmul.f32 %v383, %v418
  %vm420 = vcmp.eq.f32.partialorder %v383, inf
  %v421 = vsel %vm420, %v383, %v419
  %vm422 = vcmp.eq.f32.partialorder %v383, 0.0
  %v423 = vand.u32 %v383, 2147483648
  %v424 = vsel %vm422, %v423, %v421
  %v425 = vrsqrt.pop %v384
  %v426 = vmul.f32 %v425, %v384
  %v427 = vmul.f32 %v426, %v425
  %v428 = vmul.f32 0.5, %v427
  %v429 = vsub.f32 1.5, %v428
  %v430 = vmul.f32 %v425, %v429
  %v431 = vmul.f32 %v384, %v430
  %vm432 = vcmp.eq.f32.partialorder %v384, inf
  %v433 = vsel %vm432, %v384, %v431
  %vm434 = vcmp.eq.f32.partialorder %v384, 0.0
  %v435 = vand.u32 %v384, 2147483648
  %v436 = vsel %vm434, %v435, %v433
  %v437 = vrsqrt.pop %v385
  %v438 = vmul.f32 %v437, %v385
  %v439 = vmul.f32 %v438, %v437
  %v440 = vmul.f32 0.5, %v439
  %v441 = vsub.f32 1.5, %v440
  %v442 = vmul.f32 %v437, %v441
  %v443 = vmul.f32 %v385, %v442
  %vm444 = vcmp.eq.f32.partialorder %v385, inf
  %v445 = vsel %vm444, %v385, %v443
  %vm446 = vcmp.eq.f32.partialorder %v385, 0.0
  %v447 = vand.u32 %v385, 2147483648
  %v448 = vsel %vm446, %v447, %v445
  %v449 = vrsqrt.pop %v386
  %v450 = vmul.f32 %v449, %v386
  %v451 = vmul.f32 %v450, %v449
  %v452 = vmul.f32 0.5, %v451
  %v453 = vsub.f32 1.5, %v452
  %v454 = vmul.f32 %v449, %v453
  %v455 = vmul.f32 %v386, %v454
  %vm456 = vcmp.eq.f32.partialorder %v386, inf
  %v457 = vsel %vm456, %v386, %v455
  %vm458 = vcmp.eq.f32.partialorder %v386, 0.0
  %v459 = vand.u32 %v386, 2147483648
  %v460 = vsel %vm458, %v459, %v457
  %v461 = vrsqrt.pop %v387
  %v462 = vmul.f32 %v461, %v387
  %v463 = vmul.f32 %v462, %v461
  %v464 = vmul.f32 0.5, %v463
  %v465 = vsub.f32 1.5, %v464
  %v466 = vmul.f32 %v461, %v465
  %v467 = vmul.f32 %v387, %v466
  %vm468 = vcmp.eq.f32.partialorder %v387, inf
  %v469 = vsel %vm468, %v387, %v467
  %vm470 = vcmp.eq.f32.partialorder %v387, 0.0
  %v471 = vand.u32 %v387, 2147483648
  %v472 = vsel %vm470, %v471, %v469
  %v473 = vrsqrt.pop %v388
  %v474 = vmul.f32 %v473, %v388
  %v475 = vmul.f32 %v474, %v473
  %v476 = vmul.f32 0.5, %v475
  %v477 = vsub.f32 1.5, %v476
  %v478 = vmul.f32 %v473, %v477
  %v479 = vmul.f32 %v388, %v478
  %vm480 = vcmp.eq.f32.partialorder %v388, inf
  %v481 = vsel %vm480, %v388, %v479
  %vm482 = vcmp.eq.f32.partialorder %v388, 0.0
  %v483 = vand.u32 %v388, 2147483648
  %v484 = vsel %vm482, %v483, %v481
  %v493 = vsel %vm276, %v412, %v400
  %v494 = vsel %vm278, %v424, %v493
  %v495 = vsel %vm280, %v436, %v494
  %v496 = vsel %vm282, %v448, %v495
  %v497 = vsel %vm284, %v460, %v496
  %v498 = vsel %vm286, %v472, %v497
  %v499 = vsel %vm288, %v484, %v498
  %501 = vst.msk [vmem:[%s4] sm:$0xff] %vm195, %v499
  // Predicated region
  $region18: #{tpu_custom_call.1} parent=0 // pred_check
    _
  $region19: #{tpu_custom_call.1} parent=0 // pred_check_branch
    %503 = sbr.rel (0) target = $region21
  $region20: #{tpu_custom_call.1} parent=0 // pred_region
    _
  $region21: #{tpu_custom_call.1} parent=0 // pred_fallthru
    _
  // Predicated region
  $region22: #{tpu_custom_call.1} parent=0 // pred_check
    _
  $region23: #{tpu_custom_call.1} parent=0 // pred_check_branch
    %505 = sbr.rel (0) target = $region25
  $region24: #{tpu_custom_call.1} parent=0 // pred_region
    _
  $region25: #{tpu_custom_call.1} parent=0 // pred_fallthru
    _
  // Predicated region
  $region26: #{tpu_custom_call.1} parent=0 // pred_check
    _
  $region27: #{tpu_custom_call.1} parent=0 // pred_check_branch
    %507 = sbr.rel (0) target = $region29
  $region28: #{tpu_custom_call.1} parent=0 // pred_region
    _
  $region29: #{tpu_custom_call.1} parent=0 // pred_fallthru
    _
  // Predicated region
  $region30: #{tpu_custom_call.1} parent=0 // pred_check
    _
  $region31: #{tpu_custom_call.1} parent=0 // pred_check_branch
    %509 = sbr.rel (0) target = $region33
  $region32: #{tpu_custom_call.1} parent=0 // pred_region
    _
  $region33: #{tpu_custom_call.1} parent=0 // pred_fallthru
    _

</llo_original>
